<compile_context>
chip_gen: v7x
topology: tpu7x:2x2x1
jax: 0.10.0
libtpu: 0.0.40
codegen_flags: <defaults>
</compile_context>

<pallas_src>
import math
import functools

import jax
import jax.numpy as jnp
from jax.experimental import pallas as pl
from jax.experimental.pallas import tpu as pltpu


def _build_pe(d_model: int, max_len: int) -> jnp.ndarray:
    """Reference sinusoidal PE buffer, shape (max_len, 1, d_model) (PyTorch layout)."""
    position = jnp.arange(max_len, dtype=jnp.float32)[:, None]
    div_term = jnp.exp(
        jnp.arange(0, d_model, 2, dtype=jnp.float32) * (-math.log(10000.0) / d_model)
    )
    angles = position * div_term
    pe = jnp.zeros((max_len, 1, d_model), dtype=jnp.float32)
    pe = pe.at[:, 0, 0::2].set(jnp.sin(angles))
    pe = pe.at[:, 0, 1::2].set(jnp.cos(angles))
    return pe


def _pos_enc_kernel(params_ref, x_ref, o_ref, *, scale, rows_per_tile):
    """Elementwise hot path on a (ts, B*D) tile.

    params_ref: (2, B*D) resident table; row 0 = per-column inverse frequency
    (tiled over batch), row 1 = per-column phase (0 for even d, pi/2 for odd d,
    since sin(a + pi/2) == cos(a)).
    """
    ts, cols = x_ref.shape
    row0 = pl.program_id(0) * rows_per_tile
    # Sequence position for every element of the tile (exact small ints).
    pos = (row0 + jax.lax.broadcasted_iota(jnp.int32, (ts, cols), 0)).astype(jnp.float32)
    freq = params_ref[0:1, :]    # (1, cols) -> broadcasts over rows
    phase = params_ref[1:2, :]   # (1, cols)
    pe = jnp.sin(pos * freq + phase)
    o_ref[...] = (x_ref[...] * scale + pe).astype(o_ref.dtype)


def _choose_seq_tile(S: int, cols: int, itemsize: int = 4,
                     target_bytes: int = 2 * 1024 * 1024) -> int:
    """Pick a seq tile: multiple of 8, ~2 MiB per block (or full S if smaller)."""
    row_bytes = max(cols * itemsize, 1)
    ts = (target_bytes // row_bytes) // 8 * 8
    ts = max(ts, 8)
    if ts >= S:
        return S
    return ts


def positional_encoding(x: jnp.ndarray, d_model: int, max_len: int = 5000) -> jnp.ndarray:
    """x: (S, B, D). Returns x * sqrt(d_model) + pe[:S] (pe broadcast over batch)."""
    S, B, D = x.shape
    assert D == d_model, "last dim of x must equal d_model"
    assert S <= max_len, "sequence length exceeds max_len"

    cols = B * D
    x2 = x.reshape(S, cols)  # free reshape: merge (B, D) -> lane-dense columns

    # Tiny host-side table: per-column inverse frequency and phase, tiled over B.
    d_idx = jnp.arange(D)
    inv_freq = jnp.exp(
        (2.0 * (d_idx // 2)).astype(jnp.float32) * (-math.log(10000.0) / d_model)
    )                                                           # (D,)
    phase = jnp.where(d_idx % 2 == 1,
                      jnp.float32(math.pi / 2.0), jnp.float32(0.0))   # (D,)
    params = jnp.stack([jnp.tile(inv_freq, B), jnp.tile(phase, B)], axis=0)  # (2, cols)

    ts = _choose_seq_tile(S, cols)
    grid = (pl.cdiv(S, ts),)

    kernel = functools.partial(_pos_enc_kernel,
                               scale=math.sqrt(d_model), rows_per_tile=ts)

    out2 = pl.pallas_call(
        kernel,
        out_shape=jax.ShapeDtypeStruct((S, cols), x.dtype),
        grid_spec=pltpu.PrefetchScalarGridSpec(
            num_scalar_prefetch=0,
            grid=grid,
            in_specs=[
                # (2, cols) table: constant block index -> fetched once, stays resident.
                pl.BlockSpec((2, cols), lambda i: (0, 0)),
                pl.BlockSpec((ts, cols), lambda i: (i, 0)),
            ],
            out_specs=pl.BlockSpec((ts, cols), lambda i: (i, 0)),
        ),
        compiler_params=pltpu.CompilerParams(
            dimension_semantics=("parallel",),       # shards across TCs on v7x
            vmem_limit_bytes=32 * 1024 * 1024,
        ),
        cost_estimate=pl.CostEstimate(
            flops=4 * S * cols,
            transcendentals=S * cols,
            bytes_accessed=2 * S * cols * 4 + 2 * cols * 4,
        ),
    )(params, x2)

    return out2.reshape(S, B, D)


if __name__ == "__main__":
    # Small shapes consistent with the module: seq=8, batch=2, d_model=32.
    S, B, D = 8, 2, 32
    max_len = 5000  # module default

    key = jax.random.PRNGKey(0)
    x = jax.random.normal(key, (S, B, D), dtype=jnp.float32)

    out = positional_encoding(x, D, max_len=max_len)
    out = jax.block_until_ready(out)

    # Pure-JAX reference matching the PyTorch module.
    pe = _build_pe(D, max_len)
    ref = x * math.sqrt(D) + pe[:S]

    assert out.shape == (S, B, D)
    assert jnp.allclose(out, ref, atol=1e-4, rtol=1e-4)

    print("KERNEL_OK")
</pallas_src>

<mosaic_0001>
module attributes {stable_mosaic.version = 11 : i64} {
  func.func @_pos_enc_kernel(%arg0: i32, %arg1: memref<2x64xf32, #tpu.memory_space<vmem>>, %arg2: memref<8x64xf32, #tpu.memory_space<vmem>>, %arg3: memref<8x64xf32, #tpu.memory_space<vmem>>) attributes {dimension_semantics = [#tpu.dimension_semantics<parallel>], iteration_bounds = array<i64: 1>, scalar_prefetch = 0 : i64, scratch_operands = 0 : i64, tpu.core_type = #tpu.core_type<tc>, window_params = [{pipeline_mode = #tpu.pipeline_mode<synchronous>, transform_indices = @transform_0, window_bounds = array<i64: 2, 64>}, {transform_indices = @transform_1, window_bounds = array<i64: 8, 64>}, {transform_indices = @transform_2, window_bounds = array<i64: 8, 64>}]} {
    %c8_i32 = arith.constant 8 : i32
    %0 = arith.muli %arg0, %c8_i32 : i32
    %1 = tpu.iota {dimensions = array<i32: 0>} : vector<8x64xi32>
    %2 = vector.broadcast %0 : i32 to vector<8x64xi32>
    %3 = arith.addi %2, %1 : vector<8x64xi32>
    %4 = arith.sitofp %3 : vector<8x64xi32> to vector<8x64xf32>
    %c0 = arith.constant 0 : index
    %c0_0 = arith.constant 0 : index
    %5 = vector.load %arg1[%c0, %c0_0] : memref<2x64xf32, #tpu.memory_space<vmem>>, vector<1x64xf32>
    %c1 = arith.constant 1 : index
    %c0_1 = arith.constant 0 : index
    %6 = vector.load %arg1[%c1, %c0_1] : memref<2x64xf32, #tpu.memory_space<vmem>>, vector<1x64xf32>
    %7 = vector.broadcast %5 : vector<1x64xf32> to vector<8x64xf32>
    %8 = arith.mulf %4, %7 : vector<8x64xf32>
    %9 = vector.broadcast %6 : vector<1x64xf32> to vector<8x64xf32>
    %10 = arith.addf %8, %9 : vector<8x64xf32>
    %11 = math.sin %10 : vector<8x64xf32>
    %c0_2 = arith.constant 0 : index
    %c0_3 = arith.constant 0 : index
    %12 = vector.load %arg2[%c0_2, %c0_3] : memref<8x64xf32, #tpu.memory_space<vmem>>, vector<8x64xf32>
    %cst = arith.constant 5.65685415 : f32
    %13 = vector.broadcast %cst : f32 to vector<8x64xf32>
    %14 = arith.mulf %12, %13 : vector<8x64xf32>
    %15 = arith.addf %14, %11 : vector<8x64xf32>
    %c0_4 = arith.constant 0 : index
    %c0_5 = arith.constant 0 : index
    %16 = vector.load %arg3[%c0_4, %c0_5] : memref<8x64xf32, #tpu.memory_space<vmem>>, vector<8x64xf32>
    tpu.vector_store %arg3[%c0_4, %c0_5], %15 {strides = array<i32>} : memref<8x64xf32, #tpu.memory_space<vmem>>, vector<8x64xf32>,
    return
  }
  func.func @transform_0(%arg0: i32) -> (i32, i32) {
    %c0_i32 = arith.constant 0 : i32
    %c0_i32_0 = arith.constant 0 : i32
    %c0_i32_1 = arith.constant 0 : i32
    return %c0_i32, %c0_i32_0 : i32, i32
  }
  func.func @transform_1(%arg0: i32) -> (i32, i32) {
    %c0_i32 = arith.constant 0 : i32
    %c0_i32_0 = arith.constant 0 : i32
    return %arg0, %c0_i32 : i32, i32
  }
  func.func @transform_2(%arg0: i32) -> (i32, i32) {
    %c0_i32 = arith.constant 0 : i32
    %c0_i32_0 = arith.constant 0 : i32
    return %arg0, %c0_i32 : i32, i32
  }
}

</mosaic_0001>

<llo_original>
// kernel: tpu_custom_call.1
$region0: #{tpu_custom_call.1}
  #allocation0 [shape = 'u32[]', space=smem, size = 0x4, offset = 0x4, fixed_abs, tag = 'smem constant byte address 0x4 - core index']
  #allocation1 [shape = 'u32[144,128]{1,0:T(1,128)}', space=vmem, size = 0x12000, scoped, tag = 'internal scratch']
  %s0 = inlined_call_operand.hbm [shape: f32[2,64], index: 0, kind: input, shape index: {}]
  %s1 = inlined_call_operand.hbm [shape: f32[8,64], index: 1, kind: input, shape index: {}]
  %s2 = inlined_call_operand.hbm [shape: f32[8,64], index: 2, kind: output, shape index: {}]
  %s3 = sld [smem:[#allocation0]]
  $region26: #{tpu_custom_call.1} parent=0
    _
  %s5 = ssub.s32 1, %s3
  %s6 = scalar_select 0, %s5, %s3
  $region1: #{tpu_custom_call.1} parent=0
    #allocation2 [shape = 'u8[1024]{0}', space=vmem, size = 0x400, scoped, tag = 'input window, operand 0, single buffered']
    #allocation3 [shape = 's32[1]{0}', space=sflag, size = 0x4, scoped, tag = 'scoped memory for tpu_custom_call.1']
    #allocation4 [shape = 's32[1]{0}', space=sflag, size = 0x4, scoped, tag = 'scoped memory for tpu_custom_call.1']
    #allocation5 [shape = 'u8[4096]{0}', space=vmem, size = 0x1000, scoped, tag = 'input window, operand 1, single buffered']
    #allocation6 [shape = 's32[1]{0}', space=sflag, size = 0x4, scoped, tag = 'scoped memory for tpu_custom_call.1']
    #allocation7 [shape = 'u8[4096]{0}', space=vmem, size = 0x1000, scoped, tag = 'output window, operand 0, single buffered']
    %7 = vsyncpa [#allocation3], 0
    %8 = vsyncpa [#allocation6], 0
    %9 = vsyncpa [#allocation4], 0
    // Predicated region
    $region2: #{tpu_custom_call.1} parent=1 // pred_check
      _
    $region3: #{tpu_custom_call.1} parent=1 // pred_check_branch
      %11 = sbr.rel (0) target = $region5
    $region4: #{tpu_custom_call.1} parent=1 // pred_region
      %s13 = ssub.s32 32, 32
      %14 = vsyncadd [#allocation3], %s13
      %s16 = sshll.u32 [#allocation2], 4
      %s17 = int_to_ptr.vmem [resolvable:$true] %s16
      %19 = dma.hbm_to_vmem [thread:$0]  %s0, 32, %s17, [#allocation3]
    $region5: #{tpu_custom_call.1} parent=1 // pred_fallthru
      _
    // Predicated region
    $region6: #{tpu_custom_call.1} parent=1 // pred_check
      _
    $region7: #{tpu_custom_call.1} parent=1 // pred_check_branch
      %21 = sbr.rel (0) target = $region9
    $region8: #{tpu_custom_call.1} parent=1 // pred_region
      %s23 = ssub.s32 128, 128
      %24 = vsyncadd [#allocation6], %s23
      %s26 = sshll.u32 [#allocation5], 4
      %s27 = int_to_ptr.vmem [resolvable:$true] %s26
      %29 = dma.hbm_to_vmem [thread:$0]  %s1, 128, %s27, [#allocation6]
    $region9: #{tpu_custom_call.1} parent=1 // pred_fallthru
      _
    // Predicated region
    $region10: #{tpu_custom_call.1} parent=1 // pred_check
      _
    $region11: #{tpu_custom_call.1} parent=1 // pred_check_branch
      %31 = sbr.rel (0) target = $region13
    $region12: #{tpu_custom_call.1} parent=1 // pred_region
      %32 = dma.done [#allocation3], 32
    $region13: #{tpu_custom_call.1} parent=1 // pred_fallthru
      _
    // Predicated region
    $region14: #{tpu_custom_call.1} parent=1 // pred_check
      _
    $region15: #{tpu_custom_call.1} parent=1 // pred_check_branch
      %34 = sbr.rel (0) target = $region17
    $region16: #{tpu_custom_call.1} parent=1 // pred_region
      %35 = dma.done [#allocation6], 128
    $region17: #{tpu_custom_call.1} parent=1 // pred_fallthru
      _
    %s36 = smul.u32 0, 8
    %v37 = vlaneseq
    %v38 = vshrl.u32 %v37, 7
    %v39 = vstv %s36
    %v40 = vadd.s32 %v39, %v38
    %v41 = vcvt.s32.f32 %v40
    %v42 = vld [vmem:[#allocation2] sm:$0x1]
    %v43 = vld [vmem:[#allocation2 + $0x1] sm:$0x1]
    %v44 = vlaneseq
    %v45 = vshrl.u32 %v44, 7
    %v46 = vsub.s32 0, %v45
    %v47 = vrot.slane %v42, %v46
    %v48 = vmul.f32 %v41, %v47
    %v49 = vlaneseq
    %v50 = vshrl.u32 %v49, 7
    %v51 = vsub.s32 0, %v50
    %v52 = vrot.slane %v43, %v51
    %v53 = vadd.f32 %v48, %v52
    %v54 = vand.u32 2147483647, %v53
    %vm55 = vcmp.le.f32.partialorder %v54, 0.7853982
    %vm56 = vcmp.lt.s32.totalorder %v53, 0
    %v57 = vand.u32 %v53, 2139095040
    %v58 = vshrl.u32 %v57, 23
    %v59 = vsub.s32 %v58, 127
    %v60 = vand.u32 2147483647, %v53
    %v61 = vand.u32 %v60, 8388607
    %v62 = vor.u32 %v61, 8388608
    %v63 = vsub.s32 0, %v62
    %v64 = vadd.s32 %v59, 1
    %vm65 = vcmp.gt.s32.totalorder %v64, 0
    %v66 = vsel %vm65, %v64, 0
    %v67 = vshrl.u32 %v66, 5
    %v68 = vand.u32 %v66, 31
    %v69 = vsub.s32 32, %v68
    %v70 = vshrl.u32 683565275, %v69
    %v71 = vshll.u32 683565275, %v68
    %v72 = vshrl.u32 2475754826, %v69
    %v73 = vor.u32 %v71, %v72
    %v74 = vshll.u32 2475754826, %v68
    %v75 = vshrl.u32 2131351028, %v69
    %v76 = vor.u32 %v74, %v75
    %v77 = vshll.u32 2131351028, %v68
    %v78 = vshrl.u32 2102212464, %v69
    %v79 = vor.u32 %v77, %v78
    %v80 = vshll.u32 2102212464, %v68
    %v81 = vshrl.u32 920167782, %v69
    %v82 = vor.u32 %v80, %v81
    %v83 = vshll.u32 920167782, %v68
    %v84 = vshrl.u32 1326507024, %v69
    %v85 = vor.u32 %v83, %v84
    %vm86 = vcmp.lt.s32.totalorder %v67, 1
    %vm87 = vcmp.lt.s32.totalorder %v67, 2
    %vm88 = vcmp.lt.s32.totalorder %v67, 3
    %vm89 = vcmp.lt.s32.totalorder %v67, 4
    %v90 = vsel %vm86, %v70, %v73
    %v91 = vsel %vm89, %v79, 2102212464
    %v92 = vsel %vm88, %v76, %v91
    %v93 = vsel %vm87, %v90, %v92
    %v94 = vsel %vm86, %v73, %v76
    %v95 = vsel %vm89, %v82, 920167782
    %v96 = vsel %vm88, %v79, %v95
    %v97 = vsel %vm87, %v94, %v96
    %v98 = vsel %vm86, %v76, %v79
    %v99 = vsel %vm89, %v85, 1326507024
    %v100 = vsel %vm88, %v82, %v99
    %v101 = vsel %vm87, %v98, %v100
    %v102 = vshll.u32 %v62, 8
    %v103 = vmul.u32.u64.compose %v102, %v101
    %v104 = vextract.low.u32 %v103
    %v105 = vextract.high.u32 %v103
    %v106 = vmul.u32.u64.compose %v102, %v97
    %v107 = vextract.low.u32 %v106
    %v108 = vextract.high.u32 %v106
    %v109 = vmul.u32 %v102, %v93
    %v110 = vadd.s32 %v105, %v107
    %vm111 = vc.u32 %v105, %v107
    %v112 = vadd.s32 %v108, 1
    %v113 = vsel %vm111, %v112, %v108
    %v114 = vadd.s32 %v109, %v113
    %v115 = vadd.s32 %v114, 536870912
    %v116 = vshrl.u32 %v115, 30
    %v117 = vshll.u32 %v116, 30
    %v118 = vsub.s32 %v114, %v117
    %vm119 = vcmp.lt.s32.totalorder %v118, 0
    %v120 = vsub.s32 0, %v118
    %v121 = vsel %vm119, %v120, %v118
    %v122 = vclz %v121
    %v123 = vsub.s32 %v122, 2
    %vm124 = vcmp.gt.s32.totalorder 0, %v123
    %v125 = vsel %vm124, 0, %v123
    %v126 = vsub.s32 32, %v125
    %v127 = vshll.u32 %v118, %v125
    %v128 = vshrl.u32 %v110, %v126
    %v129 = vor.u32 %v127, %v128
    %v130 = vsub.s32 4294967266, %v125
    %v131 = vadd.s32 %v130, 127
    %v132 = vshll.u32 %v131, 23
    %v133 = vor.u32 4788187, %v132
    %v134 = vand.u32 2147483647, %v133
    %v136 = vcvt.s32.f32 %v129
    %v137 = vmul.f32 %v136, %v134
    %v138 = vxor.u32 %v137, 2147483648
    %v139 = vsel %vm56, %v138, %v137
    %v140 = vsub.s32 4, %v116
    %v141 = vsel %vm56, %v140, %v116
    %v142 = vsel %vm55, %v53, %v139
    %v143 = vsel %vm55, 0, %v141
    %v144 = vcosq.f32.pop %v142
    %v145 = vsinq.f32.pop %v142
    %vm146 = vweird.f32 %v53
    %v147 = vadd.s32 %v143, 3
    %v148 = vand.u32 %v147, 3
    %vm149 = vcmp.lt.s32.totalorder %v148, 2
    %vm150 = vcmp.eq.s32.totalorder %v148, 0
    %v151 = vxor.u32 %v145, 2147483648
    %v152 = vsel %vm150, %v144, %v151
    %vm153 = vcmp.eq.s32.totalorder %v148, 2
    %v154 = vxor.u32 %v144, 2147483648
    %v155 = vsel %vm153, %v154, %v145
    %v156 = vsel %vm149, %v152, %v155
    %v157 = vsel %vm146, nan, %v156
    %v158 = vld [vmem:[#allocation5] sm:$0xff]
    %v159 = vmul.f32 %v158, 5.656854
    %v160 = vadd.f32 %v159, %v157
    %vm161 = vcmask 523264
    %162 = vst.msk [vmem:[#allocation7] sm:$0xff] %vm161, %v160
    // Predicated region
    $region18: #{tpu_custom_call.1} parent=1 // pred_check
      _
    $region19: #{tpu_custom_call.1} parent=1 // pred_check_branch
      %164 = sbr.rel (0) target = $region21
    $region20: #{tpu_custom_call.1} parent=1 // pred_region
      %s166 = ssub.s32 128, 128
      %167 = vsyncadd [#allocation4], %s166
      %s169 = sshll.u32 [#allocation7], 4
      %s170 = int_to_ptr.vmem [resolvable:$true] %s169
      %172 = dma.vmem_to_hbm [thread:$0]  %s170, 128, %s2, [#allocation4]
    $region21: #{tpu_custom_call.1} parent=1 // pred_fallthru
      _
    // Predicated region
    $region22: #{tpu_custom_call.1} parent=1 // pred_check
      _
    $region23: #{tpu_custom_call.1} parent=1 // pred_check_branch
      %174 = sbr.rel (0) target = $region25
    $region24: #{tpu_custom_call.1} parent=1 // pred_region
      %175 = dma.done [#allocation4], 128
    $region25: #{tpu_custom_call.1} parent=1 // pred_fallthru
      _
    %176 = vsyncpa [#allocation3], 1
    %177 = vsyncpa [#allocation6], 1
    %178 = vsyncpa [#allocation4], 1

</llo_original>
